<compile_context>
chip_gen: v7x
topology: tpu7x:2x2x1
jax: 0.10.0
libtpu: 0.0.40
codegen_flags: <defaults>
</compile_context>

<pallas_src>
import functools

import jax
import jax.numpy as jnp
from jax import lax
from jax.experimental import pallas as pl
from jax.experimental.pallas import tpu as pltpu

INPUT_DIM = 24
ENCODING_DIM = 12
HIDDEN_DIM = 48

# Rough per-batch-column VMEM cost (bytes): double-buffered bf16 x/out tiles
# (2*24*2 + 2*24*2 = 192 B) + f32/bf16 intermediates (~800 B) + margin.
_VMEM_BYTES_PER_COL = 1536
# Hard cap on the batch tile (lane) width.
_MAX_TILE_CAP = 32768


def _round_up(n, m):
    return ((n + m - 1) // m) * m


def _physical_vmem_bytes():
    """Per-TensorCore VMEM capacity; conservative fallback if query fails."""
    try:
        return int(pltpu.get_tpu_info().vmem_capacity_bytes)
    except Exception:
        return 64 << 20  # v7x per-core VMEM (smallest of the target chips)


def _default_max_tile():
    """Biggest batch tile whose working set fits ~1/3 of physical VMEM."""
    vmem = _physical_vmem_bytes()
    tile = (vmem // 3) // _VMEM_BYTES_PER_COL
    tile = (tile // 128) * 128
    return int(max(128, min(_MAX_TILE_CAP, tile)))


def sae_kernel(x_ref, w1_ref, b1_ref, w2_ref, b2_ref,
               w3_ref, b3_ref, w4_ref, b4_ref, out_ref):
    """One batch tile.

    x_ref  : (TB, 24)  bf16, natural layout (no wrapper transpose needed).
    out_ref: (24, TB)  bf16, transposed lane-dense layout (full-width stores).
    Weights are PyTorch-layout (out_features, in_features) bf16; biases are
    (out_features, 1) f32 columns broadcast over the batch-lane axis.
    """
    x_blk = x_ref[...]                                                    # (TB, 24) bf16

    # encoder Linear(24 -> 48) + ReLU:  h1^T = W1 @ x^T
    # Contract the feature dims of both operands so the operand transpose
    # happens on the MXU/XLU slot instead of as an HBM pass in the wrapper.
    h1 = lax.dot_general(w1_ref[...], x_blk,
                         dimension_numbers=(((1,), (1,)), ((), ())),
                         preferred_element_type=jnp.float32)              # (48, TB)
    h1 = jnp.maximum(h1 + b1_ref[...], 0.0)

    # encoder Linear(48 -> 12)
    enc = jnp.dot(w2_ref[...], h1.astype(jnp.bfloat16),
                  preferred_element_type=jnp.float32) + b2_ref[...]       # (12, TB)

    # decoder Linear(12 -> 48) + ReLU
    h2 = jnp.dot(w3_ref[...], enc.astype(jnp.bfloat16),
                 preferred_element_type=jnp.float32)
    h2 = jnp.maximum(h2 + b3_ref[...], 0.0)                               # (48, TB)

    # decoder Linear(48 -> 24)
    dec = jnp.dot(w4_ref[...], h2.astype(jnp.bfloat16),
                  preferred_element_type=jnp.float32) + b4_ref[...]       # (24, TB)

    out_ref[...] = dec.astype(out_ref.dtype)


@functools.partial(jax.jit, static_argnames=("max_tile", "vmem_phys"))
def _sae_forward_2d(x2d, params, max_tile, vmem_phys):
    batch = x2d.shape[0]
    w1, b1, w2, b2, w3, b3, w4, b4 = params

    # Guard: the batch tile must be a multiple of 128 lanes.
    max_tile = max(128, _round_up(int(max_tile), 128))

    # Balanced tiles: choose num_tiles first (>=2 so both v7x TensorCores get
    # work), then the smallest 128-multiple tile that covers the batch.
    num_tiles = max(2, pl.cdiv(batch, max_tile))
    tb = _round_up(pl.cdiv(batch, num_tiles), 128)
    padded = num_tiles * tb

    # bf16 input in natural (batch, feat) layout: cast + zero-pad is a single
    # fused XLA pass; no wrapper-side transpose of x at all.
    x_b = jnp.pad(x2d.astype(jnp.bfloat16), ((0, padded - batch), (0, 0)))

    # Cast weights to bf16 once (MXU fast path, halved parameter bytes).
    w1b, w2b, w3b, w4b = (w.astype(jnp.bfloat16) for w in (w1, w2, w3, w4))

    # Explicit scoped-VMEM budget so large tiles compile on every generation,
    # while staying well under physical VMEM (64 MiB/TC on v7x).
    vmem_limit = int(min(int(0.9 * vmem_phys),
                         max(32 << 20,
                             int(tb * _VMEM_BYTES_PER_COL * 1.5) + (4 << 20))))

    pinned = lambda shape: pl.BlockSpec(shape, lambda i: (0, 0))

    out_t = pl.pallas_call(
        sae_kernel,
        out_shape=jax.ShapeDtypeStruct((INPUT_DIM, padded), jnp.bfloat16),
        grid=(num_tiles,),
        in_specs=[
            pl.BlockSpec((tb, INPUT_DIM), lambda i: (i, 0)),   # x batch tile (natural layout)
            pinned((HIDDEN_DIM, INPUT_DIM)),                   # w1 (48, 24)
            pinned((HIDDEN_DIM, 1)),                           # b1 (48, 1)
            pinned((ENCODING_DIM, HIDDEN_DIM)),                # w2 (12, 48)
            pinned((ENCODING_DIM, 1)),                         # b2 (12, 1)
            pinned((HIDDEN_DIM, ENCODING_DIM)),                # w3 (48, 12)
            pinned((HIDDEN_DIM, 1)),                           # b3 (48, 1)
            pinned((INPUT_DIM, HIDDEN_DIM)),                   # w4 (24, 48)
            pinned((INPUT_DIM, 1)),                            # b4 (24, 1)
        ],
        out_specs=pl.BlockSpec((INPUT_DIM, tb), lambda i: (0, i)),
        compiler_params=pltpu.CompilerParams(
            dimension_semantics=("parallel",),     # shard tiles across v7x's 2 TCs
            vmem_limit_bytes=vmem_limit),
    )(x_b, w1b, b1, w2b, b2, w3b, b3, w4b, b4)

    # Single wrapper post-pass: un-transpose, drop batch padding, upcast.
    return out_t[:, :batch].T.astype(x2d.dtype)


def sparse_autoencoder_forward(x, params, max_tile=None):
    """Mirrors SparseAutoencoder.forward: returns `decoded`.

    The `predict` head exists in __init__ but is unused in forward, so it is
    intentionally not part of this kernel.
    """
    if max_tile is None:
        max_tile = _default_max_tile()
    vmem_phys = _physical_vmem_bytes()

    original_shape = x.shape
    x2d = x.reshape(original_shape[0], -1) if x.ndim == 3 else x
    assert x2d.shape[-1] == INPUT_DIM, f"expected {INPUT_DIM} features, got {x2d.shape}"

    decoded = _sae_forward_2d(x2d, params, max_tile=int(max_tile),
                              vmem_phys=int(vmem_phys))

    if len(original_shape) == 3:
        decoded = decoded.reshape(original_shape)
    return decoded


def init_params(key):
    """PyTorch-style uniform(-1/sqrt(fan_in), 1/sqrt(fan_in)) init.

    Weights are PyTorch-layout (out_features, in_features); biases are
    (out_features, 1) columns (broadcast over the batch-lane axis in-kernel).
    """
    def linear(key, fan_in, fan_out):
        kw, kb = jax.random.split(key)
        bound = 1.0 / jnp.sqrt(float(fan_in))
        w = jax.random.uniform(kw, (fan_out, fan_in), jnp.float32, -bound, bound)
        b = jax.random.uniform(kb, (fan_out, 1), jnp.float32, -bound, bound)
        return w, b

    k1, k2, k3, k4 = jax.random.split(key, 4)
    w1, b1 = linear(k1, INPUT_DIM, HIDDEN_DIM)     # encoder[0]
    w2, b2 = linear(k2, HIDDEN_DIM, ENCODING_DIM)  # encoder[2]
    w3, b3 = linear(k3, ENCODING_DIM, HIDDEN_DIM)  # decoder[0]
    w4, b4 = linear(k4, HIDDEN_DIM, INPUT_DIM)     # decoder[2]
    return (w1, b1, w2, b2, w3, b3, w4, b4)


def reference_forward(x, params):
    """Plain-JAX f32 reference for correctness checking."""
    original_shape = x.shape
    if x.ndim == 3:
        x = x.reshape(original_shape[0], -1)
    w1, b1, w2, b2, w3, b3, w4, b4 = params
    h = jnp.maximum(x @ w1.T + b1[:, 0], 0.0)
    enc = h @ w2.T + b2[:, 0]
    h = jnp.maximum(enc @ w3.T + b3[:, 0], 0.0)
    dec = h @ w4.T + b4[:, 0]
    if len(original_shape) == 3:
        dec = dec.reshape(original_shape)
    return dec


if __name__ == "__main__":
    key = jax.random.PRNGKey(0)
    k_params, k_x, k_x2 = jax.random.split(key, 3)

    params = init_params(k_params)

    # 3D input (batch, seq, feat) with seq*feat == input_dim, exercising the
    # flatten / un-flatten path of forward() (default, generation-aware tile).
    x = jax.random.normal(k_x, (2, 8, 3), dtype=jnp.float32)
    out = jax.block_until_ready(sparse_autoencoder_forward(x, params))
    ref = reference_forward(x, params)
    assert out.shape == x.shape, (out.shape, x.shape)
    # bf16 MXU operands + bf16 output (f32 accumulation) => loosened tolerance.
    assert jnp.allclose(out, ref, atol=5e-2, rtol=5e-2), "kernel mismatch vs reference (3D)"

    # 2D input with a non-multiple batch, forced small tile => multi-step grid
    # (300 rows -> 3 balanced tiles of 128) exercising pipelining, pinned
    # weights, balanced-tile padding, and the lane-dense output path.
    x_big = jax.random.normal(k_x2, (300, INPUT_DIM), dtype=jnp.float32)
    out_big = jax.block_until_ready(
        sparse_autoencoder_forward(x_big, params, max_tile=128))
    ref_big = reference_forward(x_big, params)
    assert out_big.shape == x_big.shape, (out_big.shape, x_big.shape)
    assert jnp.allclose(out_big, ref_big, atol=5e-2, rtol=5e-2), "kernel mismatch vs reference (2D tiled)"

    print("KERNEL_OK")
</pallas_src>

<mosaic_0001>
module attributes {stable_mosaic.version = 11 : i64} {
  func.func @sae_kernel(%arg0: i32, %arg1: memref<128x24xbf16, #tpu.memory_space<vmem>>, %arg2: memref<48x24xbf16, #tpu.memory_space<vmem>>, %arg3: memref<48x1xf32, #tpu.memory_space<vmem>>, %arg4: memref<12x48xbf16, #tpu.memory_space<vmem>>, %arg5: memref<12x1xf32, #tpu.memory_space<vmem>>, %arg6: memref<48x12xbf16, #tpu.memory_space<vmem>>, %arg7: memref<48x1xf32, #tpu.memory_space<vmem>>, %arg8: memref<24x48xbf16, #tpu.memory_space<vmem>>, %arg9: memref<24x1xf32, #tpu.memory_space<vmem>>, %arg10: memref<24x128xbf16, #tpu.memory_space<vmem>>) attributes {dimension_semantics = [#tpu.dimension_semantics<parallel>], iteration_bounds = array<i64: 2>, scalar_prefetch = 0 : i64, scratch_operands = 0 : i64, tpu.core_type = #tpu.core_type<tc>, window_params = [{transform_indices = @transform_0, window_bounds = array<i64: 128, 24>}, {pipeline_mode = #tpu.pipeline_mode<synchronous>, transform_indices = @transform_1, window_bounds = array<i64: 48, 24>}, {pipeline_mode = #tpu.pipeline_mode<synchronous>, transform_indices = @transform_2, window_bounds = array<i64: 48, 1>}, {pipeline_mode = #tpu.pipeline_mode<synchronous>, transform_indices = @transform_3, window_bounds = array<i64: 12, 48>}, {pipeline_mode = #tpu.pipeline_mode<synchronous>, transform_indices = @transform_4, window_bounds = array<i64: 12, 1>}, {pipeline_mode = #tpu.pipeline_mode<synchronous>, transform_indices = @transform_5, window_bounds = array<i64: 48, 12>}, {pipeline_mode = #tpu.pipeline_mode<synchronous>, transform_indices = @transform_6, window_bounds = array<i64: 48, 1>}, {pipeline_mode = #tpu.pipeline_mode<synchronous>, transform_indices = @transform_7, window_bounds = array<i64: 24, 48>}, {pipeline_mode = #tpu.pipeline_mode<synchronous>, transform_indices = @transform_8, window_bounds = array<i64: 24, 1>}, {transform_indices = @transform_9, window_bounds = array<i64: 24, 128>}]} {
    %c0 = arith.constant 0 : index
    %c0_0 = arith.constant 0 : index
    %0 = vector.load %arg1[%c0, %c0_0] : memref<128x24xbf16, #tpu.memory_space<vmem>>, vector<128x24xbf16>
    %c0_1 = arith.constant 0 : index
    %c0_2 = arith.constant 0 : index
    %1 = vector.load %arg2[%c0_1, %c0_2] : memref<48x24xbf16, #tpu.memory_space<vmem>>, vector<48x24xbf16>
    %cst = arith.constant dense<0.000000e+00> : vector<48x128xf32>
    %2 = tpu.matmul %1, %0, %cst {dimension_numbers = #tpu.dot_dimension_numbers<[1], [1], [0], [0], [0, 0, 1, 0], [], []>} : vector<48x24xbf16>, vector<128x24xbf16>, vector<48x128xf32> -> vector<48x128xf32>
    %c0_3 = arith.constant 0 : index
    %c0_4 = arith.constant 0 : index
    %3 = vector.load %arg3[%c0_3, %c0_4] : memref<48x1xf32, #tpu.memory_space<vmem>>, vector<48x1xf32>
    %4 = vector.broadcast %3 : vector<48x1xf32> to vector<48x128xf32>
    %5 = arith.addf %2, %4 : vector<48x128xf32>
    %cst_5 = arith.constant 0.000000e+00 : f32
    %6 = vector.broadcast %cst_5 : f32 to vector<48x128xf32>
    %7 = arith.maximumf %5, %6 : vector<48x128xf32>
    %c0_6 = arith.constant 0 : index
    %c0_7 = arith.constant 0 : index
    %8 = vector.load %arg4[%c0_6, %c0_7] : memref<12x48xbf16, #tpu.memory_space<vmem>>, vector<12x48xbf16>
    %9 = arith.truncf %7 : vector<48x128xf32> to vector<48x128xbf16>
    %cst_8 = arith.constant dense<0.000000e+00> : vector<12x128xf32>
    %10 = tpu.matmul %8, %9, %cst_8 {dimension_numbers = #tpu.dot_dimension_numbers<[1], [0], [0], [1], [0, 0, 1, 1], [], []>} : vector<12x48xbf16>, vector<48x128xbf16>, vector<12x128xf32> -> vector<12x128xf32>
    %c0_9 = arith.constant 0 : index
    %c0_10 = arith.constant 0 : index
    %11 = vector.load %arg5[%c0_9, %c0_10] : memref<12x1xf32, #tpu.memory_space<vmem>>, vector<12x1xf32>
    %12 = vector.broadcast %11 : vector<12x1xf32> to vector<12x128xf32>
    %13 = arith.addf %10, %12 : vector<12x128xf32>
    %c0_11 = arith.constant 0 : index
    %c0_12 = arith.constant 0 : index
    %14 = vector.load %arg6[%c0_11, %c0_12] : memref<48x12xbf16, #tpu.memory_space<vmem>>, vector<48x12xbf16>
    %15 = arith.truncf %13 : vector<12x128xf32> to vector<12x128xbf16>
    %cst_13 = arith.constant dense<0.000000e+00> : vector<48x128xf32>
    %16 = tpu.matmul %14, %15, %cst_13 {dimension_numbers = #tpu.dot_dimension_numbers<[1], [0], [0], [1], [0, 0, 1, 1], [], []>} : vector<48x12xbf16>, vector<12x128xbf16>, vector<48x128xf32> -> vector<48x128xf32>
    %c0_14 = arith.constant 0 : index
    %c0_15 = arith.constant 0 : index
    %17 = vector.load %arg7[%c0_14, %c0_15] : memref<48x1xf32, #tpu.memory_space<vmem>>, vector<48x1xf32>
    %18 = vector.broadcast %17 : vector<48x1xf32> to vector<48x128xf32>
    %19 = arith.addf %16, %18 : vector<48x128xf32>
    %cst_16 = arith.constant 0.000000e+00 : f32
    %20 = vector.broadcast %cst_16 : f32 to vector<48x128xf32>
    %21 = arith.maximumf %19, %20 : vector<48x128xf32>
    %c0_17 = arith.constant 0 : index
    %c0_18 = arith.constant 0 : index
    %22 = vector.load %arg8[%c0_17, %c0_18] : memref<24x48xbf16, #tpu.memory_space<vmem>>, vector<24x48xbf16>
    %23 = arith.truncf %21 : vector<48x128xf32> to vector<48x128xbf16>
    %cst_19 = arith.constant dense<0.000000e+00> : vector<24x128xf32>
    %24 = tpu.matmul %22, %23, %cst_19 {dimension_numbers = #tpu.dot_dimension_numbers<[1], [0], [0], [1], [0, 0, 1, 1], [], []>} : vector<24x48xbf16>, vector<48x128xbf16>, vector<24x128xf32> -> vector<24x128xf32>
    %c0_20 = arith.constant 0 : index
    %c0_21 = arith.constant 0 : index
    %25 = vector.load %arg9[%c0_20, %c0_21] : memref<24x1xf32, #tpu.memory_space<vmem>>, vector<24x1xf32>
    %26 = vector.broadcast %25 : vector<24x1xf32> to vector<24x128xf32>
    %27 = arith.addf %24, %26 : vector<24x128xf32>
    %28 = arith.truncf %27 : vector<24x128xf32> to vector<24x128xbf16>
    %c0_22 = arith.constant 0 : index
    %c0_23 = arith.constant 0 : index
    %29 = vector.load %arg10[%c0_22, %c0_23] : memref<24x128xbf16, #tpu.memory_space<vmem>>, vector<24x128xbf16>
    tpu.vector_store %arg10[%c0_22, %c0_23], %28 {strides = array<i32>} : memref<24x128xbf16, #tpu.memory_space<vmem>>, vector<24x128xbf16>,
    return
  }
  func.func @transform_0(%arg0: i32) -> (i32, i32) {
    %c0_i32 = arith.constant 0 : i32
    %c0_i32_0 = arith.constant 0 : i32
    return %arg0, %c0_i32 : i32, i32
  }
  func.func @transform_1(%arg0: i32) -> (i32, i32) {
    %c0_i32 = arith.constant 0 : i32
    %c0_i32_0 = arith.constant 0 : i32
    %c0_i32_1 = arith.constant 0 : i32
    return %c0_i32, %c0_i32_0 : i32, i32
  }
  func.func @transform_2(%arg0: i32) -> (i32, i32) {
    %c0_i32 = arith.constant 0 : i32
    %c0_i32_0 = arith.constant 0 : i32
    %c0_i32_1 = arith.constant 0 : i32
    return %c0_i32, %c0_i32_0 : i32, i32
  }
  func.func @transform_3(%arg0: i32) -> (i32, i32) {
    %c0_i32 = arith.constant 0 : i32
    %c0_i32_0 = arith.constant 0 : i32
    %c0_i32_1 = arith.constant 0 : i32
    return %c0_i32, %c0_i32_0 : i32, i32
  }
  func.func @transform_4(%arg0: i32) -> (i32, i32) {
    %c0_i32 = arith.constant 0 : i32
    %c0_i32_0 = arith.constant 0 : i32
    %c0_i32_1 = arith.constant 0 : i32
    return %c0_i32, %c0_i32_0 : i32, i32
  }
  func.func @transform_5(%arg0: i32) -> (i32, i32) {
    %c0_i32 = arith.constant 0 : i32
    %c0_i32_0 = arith.constant 0 : i32
    %c0_i32_1 = arith.constant 0 : i32
    return %c0_i32, %c0_i32_0 : i32, i32
  }
  func.func @transform_6(%arg0: i32) -> (i32, i32) {
    %c0_i32 = arith.constant 0 : i32
    %c0_i32_0 = arith.constant 0 : i32
    %c0_i32_1 = arith.constant 0 : i32
    return %c0_i32, %c0_i32_0 : i32, i32
  }
  func.func @transform_7(%arg0: i32) -> (i32, i32) {
    %c0_i32 = arith.constant 0 : i32
    %c0_i32_0 = arith.constant 0 : i32
    %c0_i32_1 = arith.constant 0 : i32
    return %c0_i32, %c0_i32_0 : i32, i32
  }
  func.func @transform_8(%arg0: i32) -> (i32, i32) {
    %c0_i32 = arith.constant 0 : i32
    %c0_i32_0 = arith.constant 0 : i32
    %c0_i32_1 = arith.constant 0 : i32
    return %c0_i32, %c0_i32_0 : i32, i32
  }
  func.func @transform_9(%arg0: i32) -> (i32, i32) {
    %c0_i32 = arith.constant 0 : i32
    %c0_i32_0 = arith.constant 0 : i32
    return %c0_i32, %arg0 : i32, i32
  }
}

</mosaic_0001>

<llo_original>
// kernel: _sae_forward_2d.1
$region0: #{_sae_forward_2d.1}
  #allocation0 [shape = 'u32[]', space=smem, size = 0x4, offset = 0x4, fixed_abs, tag = 'smem constant byte address 0x4 - core index']
  #allocation1 [shape = 'u32[144,128]{1,0:T(1,128)}', space=vmem, size = 0x12000, scoped, tag = 'internal scratch']
  %s0 = inlined_call_operand.vmem [shape: bf16[256,24], index: 0, kind: input, shape index: {}]
  %s1 = inlined_call_operand.vmem [shape: bf16[48,24], index: 1, kind: input, shape index: {}]
  %s2 = inlined_call_operand.vmem [shape: f32[48,1], index: 2, kind: input, shape index: {}]
  %s3 = inlined_call_operand.vmem [shape: bf16[12,48], index: 3, kind: input, shape index: {}]
  %s4 = inlined_call_operand.vmem [shape: f32[12,1], index: 4, kind: input, shape index: {}]
  %s5 = inlined_call_operand.vmem [shape: bf16[48,12], index: 5, kind: input, shape index: {}]
  %s6 = inlined_call_operand.vmem [shape: f32[48,1], index: 6, kind: input, shape index: {}]
  %s7 = inlined_call_operand.vmem [shape: bf16[24,48], index: 7, kind: input, shape index: {}]
  %s8 = inlined_call_operand.vmem [shape: f32[24,1], index: 8, kind: input, shape index: {}]
  %s9 = inlined_call_operand.vmem [shape: bf16[24,256], index: 9, kind: output, shape index: {}]
  %s10 = sld [smem:[#allocation0]]
  $region106: #{_sae_forward_2d.1} parent=0
    _
  %s12 = ssub.s32 1, %s10
  %s13 = scalar_select 0, %s12, %s10
  $region1: #{_sae_forward_2d.1} parent=0
    #allocation2 [shape = 'u8[12288]{0}', space=vmem, size = 0x3000, scoped, tag = 'output window, operand 0']
    loop: start=0, step=1, limit=4
    $region2: #{_sae_forward_2d.1} parent=1 // loop_pre_header
      _
    $region3: #{_sae_forward_2d.1} parent=1 // loop_header
      %s15 = sphi 0, %s19
      %p16 = scmp.ge.s32.totalorder %s15, 4
      %s25 = sphi 0, %s27
      %s28 = sphi 0, %s25
      %s29 = sphi 0, %s28
      %s45 = sphi 0, %s29
      %s49 = sphi 0, %s49
      %s51 = sphi 0, %s49
      %s52 = sphi 0, %s51
      %s66 = sphi 0, %s52
      %s70 = sphi 0, %s70
      %s72 = sphi 0, %s70
      %s73 = sphi 0, %s72
      %s87 = sphi 0, %s73
      %s91 = sphi 0, %s91
      %s93 = sphi 0, %s91
      %s94 = sphi 0, %s93
      %s108 = sphi 0, %s94
      %s112 = sphi 0, %s112
      %s114 = sphi 0, %s112
      %s115 = sphi 0, %s114
      %s129 = sphi 0, %s115
      %s133 = sphi 0, %s133
      %s135 = sphi 0, %s133
      %s136 = sphi 0, %s135
      %s150 = sphi 0, %s136
      %s154 = sphi 0, %s154
      %s156 = sphi 0, %s154
      %s157 = sphi 0, %s156
      %s171 = sphi 0, %s157
      %s175 = sphi 0, %s175
      %s177 = sphi 0, %s175
      %s178 = sphi 0, %s177
      %s192 = sphi 0, %s178
      %s196 = sphi 0, %s196
      %s198 = sphi 0, %s196
      %s199 = sphi 0, %s198
      %s213 = sphi 0, %s199
      %s219 = sphi 0, %s221
      %s222 = sphi 0, %s219
      %s223 = sphi 0, %s222
      %s239 = sphi 0, %s223
    $region4: #{_sae_forward_2d.1} parent=1 // loop_header_branch
      %18 = sbr.rel (%p16) target = $region8
    $region5: #{_sae_forward_2d.1} parent=1 // loop_body
      %s20 = ssub.s32 %s15, 1
      %s21 = ssub.s32 %s15, 2
      %s22 = sadd.s32 %s15, 1
      %s23 = ssub.s32 %s15, %s22
      %p24 = scmp.eq.s32.totalorder %s23, 0
      %s26 = sadd.s32 %s25, 1
      %s27 = scalar_select %p24, %s25, %s26
      %p30 = pneg %p24
      %p31 = scmp.eq.s32.totalorder %s15, 1
      %p32 = por %p30, %p31
      %p33 = scmp.ne.s32.totalorder %s25, %s28
      %p34 = scmp.eq.s32.totalorder %s15, 0
      %p35 = por %p33, %p34
      %p36 = scmp.ne.s32.totalorder %s25, %s28
      %p37 = scmp.eq.s32.totalorder %s20, 1
      %p38 = por %p36, %p37
      %p39 = scmp.ne.s32.totalorder %s28, %s29
      %p40 = scmp.eq.s32.totalorder %s20, 0
      %p41 = por %p39, %p40
      %p42 = scmp.ne.s32.totalorder %s28, %s29
      %p43 = scmp.eq.s32.totalorder %s21, 1
      %p44 = por %p42, %p43
      %p46 = scmp.ne.s32.totalorder %s29, %s45
      %p47 = scmp.eq.s32.totalorder %s21, 0
      %p48 = por %p46, %p47
      %s50 = sadd.s32 %s49, 1
      %p53 = scmp.eq.s32.totalorder %s15, 1
      %p54 = scmp.ne.s32.totalorder %s49, %s51
      %p55 = scmp.eq.s32.totalorder %s15, 0
      %p56 = por %p54, %p55
      %p57 = scmp.ne.s32.totalorder %s49, %s51
      %p58 = scmp.eq.s32.totalorder %s20, 1
      %p59 = por %p57, %p58
      %p60 = scmp.ne.s32.totalorder %s51, %s52
      %p61 = scmp.eq.s32.totalorder %s20, 0
      %p62 = por %p60, %p61
      %p63 = scmp.ne.s32.totalorder %s51, %s52
      %p64 = scmp.eq.s32.totalorder %s21, 1
      %p65 = por %p63, %p64
      %p67 = scmp.ne.s32.totalorder %s52, %s66
      %p68 = scmp.eq.s32.totalorder %s21, 0
      %p69 = por %p67, %p68
      %s71 = sadd.s32 %s70, 1
      %p74 = scmp.eq.s32.totalorder %s15, 1
      %p75 = scmp.ne.s32.totalorder %s70, %s72
      %p76 = scmp.eq.s32.totalorder %s15, 0
      %p77 = por %p75, %p76
      %p78 = scmp.ne.s32.totalorder %s70, %s72
      %p79 = scmp.eq.s32.totalorder %s20, 1
      %p80 = por %p78, %p79
      %p81 = scmp.ne.s32.totalorder %s72, %s73
      %p82 = scmp.eq.s32.totalorder %s20, 0
      %p83 = por %p81, %p82
      %p84 = scmp.ne.s32.totalorder %s72, %s73
      %p85 = scmp.eq.s32.totalorder %s21, 1
      %p86 = por %p84, %p85
      %p88 = scmp.ne.s32.totalorder %s73, %s87
      %p89 = scmp.eq.s32.totalorder %s21, 0
      %p90 = por %p88, %p89
      %s92 = sadd.s32 %s91, 1
      %p95 = scmp.eq.s32.totalorder %s15, 1
      %p96 = scmp.ne.s32.totalorder %s91, %s93
      %p97 = scmp.eq.s32.totalorder %s15, 0
      %p98 = por %p96, %p97
      %p99 = scmp.ne.s32.totalorder %s91, %s93
      %p100 = scmp.eq.s32.totalorder %s20, 1
      %p101 = por %p99, %p100
      %p102 = scmp.ne.s32.totalorder %s93, %s94
      %p103 = scmp.eq.s32.totalorder %s20, 0
      %p104 = por %p102, %p103
      %p105 = scmp.ne.s32.totalorder %s93, %s94
      %p106 = scmp.eq.s32.totalorder %s21, 1
      %p107 = por %p105, %p106
      %p109 = scmp.ne.s32.totalorder %s94, %s108
      %p110 = scmp.eq.s32.totalorder %s21, 0
      %p111 = por %p109, %p110
      %s113 = sadd.s32 %s112, 1
      %p116 = scmp.eq.s32.totalorder %s15, 1
      %p117 = scmp.ne.s32.totalorder %s112, %s114
      %p118 = scmp.eq.s32.totalorder %s15, 0
      %p119 = por %p117, %p118
      %p120 = scmp.ne.s32.totalorder %s112, %s114
      %p121 = scmp.eq.s32.totalorder %s20, 1
      %p122 = por %p120, %p121
      %p123 = scmp.ne.s32.totalorder %s114, %s115
      %p124 = scmp.eq.s32.totalorder %s20, 0
      %p125 = por %p123, %p124
      %p126 = scmp.ne.s32.totalorder %s114, %s115
      %p127 = scmp.eq.s32.totalorder %s21, 1
      %p128 = por %p126, %p127
      %p130 = scmp.ne.s32.totalorder %s115, %s129
      %p131 = scmp.eq.s32.totalorder %s21, 0
      %p132 = por %p130, %p131
      %s134 = sadd.s32 %s133, 1
      %p137 = scmp.eq.s32.totalorder %s15, 1
      %p138 = scmp.ne.s32.totalorder %s133, %s135
      %p139 = scmp.eq.s32.totalorder %s15, 0
      %p140 = por %p138, %p139
      %p141 = scmp.ne.s32.totalorder %s133, %s135
      %p142 = scmp.eq.s32.totalorder %s20, 1
      %p143 = por %p141, %p142
      %p144 = scmp.ne.s32.totalorder %s135, %s136
      %p145 = scmp.eq.s32.totalorder %s20, 0
      %p146 = por %p144, %p145
      %p147 = scmp.ne.s32.totalorder %s135, %s136
      %p148 = scmp.eq.s32.totalorder %s21, 1
      %p149 = por %p147, %p148
      %p151 = scmp.ne.s32.totalorder %s136, %s150
      %p152 = scmp.eq.s32.totalorder %s21, 0
      %p153 = por %p151, %p152
      %s155 = sadd.s32 %s154, 1
      %p158 = scmp.eq.s32.totalorder %s15, 1
      %p159 = scmp.ne.s32.totalorder %s154, %s156
      %p160 = scmp.eq.s32.totalorder %s15, 0
      %p161 = por %p159, %p160
      %p162 = scmp.ne.s32.totalorder %s154, %s156
      %p163 = scmp.eq.s32.totalorder %s20, 1
      %p164 = por %p162, %p163
      %p165 = scmp.ne.s32.totalorder %s156, %s157
      %p166 = scmp.eq.s32.totalorder %s20, 0
      %p167 = por %p165, %p166
      %p168 = scmp.ne.s32.totalorder %s156, %s157
      %p169 = scmp.eq.s32.totalorder %s21, 1
      %p170 = por %p168, %p169
      %p172 = scmp.ne.s32.totalorder %s157, %s171
      %p173 = scmp.eq.s32.totalorder %s21, 0
      %p174 = por %p172, %p173
      %s176 = sadd.s32 %s175, 1
      %p179 = scmp.eq.s32.totalorder %s15, 1
      %p180 = scmp.ne.s32.totalorder %s175, %s177
      %p181 = scmp.eq.s32.totalorder %s15, 0
      %p182 = por %p180, %p181
      %p183 = scmp.ne.s32.totalorder %s175, %s177
      %p184 = scmp.eq.s32.totalorder %s20, 1
      %p185 = por %p183, %p184
      %p186 = scmp.ne.s32.totalorder %s177, %s178
      %p187 = scmp.eq.s32.totalorder %s20, 0
      %p188 = por %p186, %p187
      %p189 = scmp.ne.s32.totalorder %s177, %s178
      %p190 = scmp.eq.s32.totalorder %s21, 1
      %p191 = por %p189, %p190
      %p193 = scmp.ne.s32.totalorder %s178, %s192
      %p194 = scmp.eq.s32.totalorder %s21, 0
      %p195 = por %p193, %p194
      %s197 = sadd.s32 %s196, 1
      %p200 = scmp.eq.s32.totalorder %s15, 1
      %p201 = scmp.ne.s32.totalorder %s196, %s198
      %p202 = scmp.eq.s32.totalorder %s15, 0
      %p203 = por %p201, %p202
      %p204 = scmp.ne.s32.totalorder %s196, %s198
      %p205 = scmp.eq.s32.totalorder %s20, 1
      %p206 = por %p204, %p205
      %p207 = scmp.ne.s32.totalorder %s198, %s199
      %p208 = scmp.eq.s32.totalorder %s20, 0
      %p209 = por %p207, %p208
      %p210 = scmp.ne.s32.totalorder %s198, %s199
      %p211 = scmp.eq.s32.totalorder %s21, 1
      %p212 = por %p210, %p211
      %p214 = scmp.ne.s32.totalorder %s199, %s213
      %p215 = scmp.eq.s32.totalorder %s21, 0
      %p216 = por %p214, %p215
      %s217 = ssub.s32 %s15, %s22
      %p218 = scmp.eq.s32.totalorder %s217, 0
      %s220 = sadd.s32 %s219, 1
      %s221 = scalar_select %p218, %s219, %s220
      %p224 = pneg %p218
      %p225 = scmp.eq.s32.totalorder %s15, 1
      %p226 = por %p224, %p225
      %p227 = scmp.ne.s32.totalorder %s219, %s222
      %p228 = scmp.eq.s32.totalorder %s15, 0
      %p229 = por %p227, %p228
      %p230 = scmp.ne.s32.totalorder %s219, %s222
      %p231 = scmp.eq.s32.totalorder %s20, 1
      %p232 = por %p230, %p231
      %p233 = scmp.ne.s32.totalorder %s222, %s223
      %p234 = scmp.eq.s32.totalorder %s20, 0
      %p235 = por %p233, %p234
      %p236 = scmp.ne.s32.totalorder %s222, %s223
      %p237 = scmp.eq.s32.totalorder %s21, 1
      %p238 = por %p236, %p237
      %p240 = scmp.ne.s32.totalorder %s223, %s239
      %p241 = scmp.eq.s32.totalorder %s21, 0
      %p242 = por %p240, %p241
      %p243 = scmp.le.s32.totalorder 1, %s15
      %p244 = scmp.lt.s32.totalorder %s15, 3
      %p245 = pnand %p243, %p244
      %p246 = pneg %p245
      // Predicated region
      $region9: #{_sae_forward_2d.1} parent=5 // pred_check
        _
      $region10: #{_sae_forward_2d.1} parent=5 // pred_check_branch
        %248 = sbr.rel (%p245) target = $region12
      $region11: #{_sae_forward_2d.1} parent=5 // pred_region
        %s249 = ssub.s32 %s15, 1
        // Predicated region
        $region13: #{_sae_forward_2d.1} parent=11 // pred_check
          %p250 = pneg %p62
        $region14: #{_sae_forward_2d.1} parent=11 // pred_check_branch
          %252 = sbr.rel (%p250) target = $region16
        $region15: #{_sae_forward_2d.1} parent=11 // pred_region
          _
        $region16: #{_sae_forward_2d.1} parent=11 // pred_fallthru
          _
        // Predicated region
        $region17: #{_sae_forward_2d.1} parent=11 // pred_check
          %p253 = pneg %p83
        $region18: #{_sae_forward_2d.1} parent=11 // pred_check_branch
          %255 = sbr.rel (%p253) target = $region20
        $region19: #{_sae_forward_2d.1} parent=11 // pred_region
          _
        $region20: #{_sae_forward_2d.1} parent=11 // pred_fallthru
          _
        // Predicated region
        $region21: #{_sae_forward_2d.1} parent=11 // pred_check
          %p256 = pneg %p104
        $region22: #{_sae_forward_2d.1} parent=11 // pred_check_branch
          %258 = sbr.rel (%p256) target = $region24
        $region23: #{_sae_forward_2d.1} parent=11 // pred_region
          _
        $region24: #{_sae_forward_2d.1} parent=11 // pred_fallthru
          _
        // Predicated region
        $region25: #{_sae_forward_2d.1} parent=11 // pred_check
          %p259 = pneg %p125
        $region26: #{_sae_forward_2d.1} parent=11 // pred_check_branch
          %261 = sbr.rel (%p259) target = $region28
        $region27: #{_sae_forward_2d.1} parent=11 // pred_region
          _
        $region28: #{_sae_forward_2d.1} parent=11 // pred_fallthru
          _
        // Predicated region
        $region29: #{_sae_forward_2d.1} parent=11 // pred_check
          %p262 = pneg %p146
        $region30: #{_sae_forward_2d.1} parent=11 // pred_check_branch
          %264 = sbr.rel (%p262) target = $region32
        $region31: #{_sae_forward_2d.1} parent=11 // pred_region
          _
        $region32: #{_sae_forward_2d.1} parent=11 // pred_fallthru
          _
        // Predicated region
        $region33: #{_sae_forward_2d.1} parent=11 // pred_check
          %p265 = pneg %p167
        $region34: #{_sae_forward_2d.1} parent=11 // pred_check_branch
          %267 = sbr.rel (%p265) target = $region36
        $region35: #{_sae_forward_2d.1} parent=11 // pred_region
          _
        $region36: #{_sae_forward_2d.1} parent=11 // pred_fallthru
          _
        // Predicated region
        $region37: #{_sae_forward_2d.1} parent=11 // pred_check
          %p268 = pneg %p188
        $region38: #{_sae_forward_2d.1} parent=11 // pred_check_branch
          %270 = sbr.rel (%p268) target = $region40
        $region39: #{_sae_forward_2d.1} parent=11 // pred_region
          _
        $region40: #{_sae_forward_2d.1} parent=11 // pred_fallthru
          _
        // Predicated region
        $region41: #{_sae_forward_2d.1} parent=11 // pred_check
          %p271 = pneg %p209
        $region42: #{_sae_forward_2d.1} parent=11 // pred_check_branch
          %273 = sbr.rel (%p271) target = $region44
        $region43: #{_sae_forward_2d.1} parent=11 // pred_region
          _
        $region44: #{_sae_forward_2d.1} parent=11 // pred_fallthru
          _
      $region12: #{_sae_forward_2d.1} parent=5 // pred_fallthru
        _
      %p274 = scmp.lt.s32.totalorder %s15, 2
      // Predicated region
      $region45: #{_sae_forward_2d.1} parent=5 // pred_check
        %p275 = pneg %p274
      $region46: #{_sae_forward_2d.1} parent=5 // pred_check_branch
        %277 = sbr.rel (%p275) target = $region48
      $region47: #{_sae_forward_2d.1} parent=5 // pred_region
        // Predicated region
        $region49: #{_sae_forward_2d.1} parent=47 // pred_check
          %p278 = pneg %p35
        $region50: #{_sae_forward_2d.1} parent=47 // pred_check_branch
          %280 = sbr.rel (%p278) target = $region52
        $region51: #{_sae_forward_2d.1} parent=47 // pred_region
          %s281 = smul.u32 16, %s15
          %p282 = scmp.lt.s32.totalorder %s281, 31
          %s283 = scalar_select %p282, %s281, 31
          %s284 = smul.addr %s283, 4
          %s285 = scalar_lea.vmem %s0, %s284
          %s286 = smul.u32 16, %s15
        $region52: #{_sae_forward_2d.1} parent=47 // pred_fallthru
          _
      $region48: #{_sae_forward_2d.1} parent=5 // pred_fallthru
        _
      %p287 = scmp.le.s32.totalorder 1, %s15
      %p288 = scmp.lt.s32.totalorder %s15, 3
      %p289 = pnand %p287, %p288
      %p290 = pneg %p289
      // Predicated region
      $region53: #{_sae_forward_2d.1} parent=5 // pred_check
        _
      $region54: #{_sae_forward_2d.1} parent=5 // pred_check_branch
        %292 = sbr.rel (%p289) target = $region56
      $region55: #{_sae_forward_2d.1} parent=5 // pred_region
        %s293 = ssub.s32 %s15, 1
        %s294 = smul.u32 16, %s20
        %p295 = scmp.lt.s32.totalorder %s294, 31
        %s296 = scalar_select %p295, %s294, 31
        %s297 = smul.addr %s296, 4
        %s298 = scalar_lea.vmem %s0, %s297
        %p299 = pneg %p41
        %p300 = pneg %p38
        %p301 = pneg %p62
        %p302 = pneg %p59
        %p303 = pneg %p83
        %p304 = pneg %p80
        %p305 = pneg %p104
        %p306 = pneg %p101
        %p307 = pneg %p125
        %p308 = pneg %p122
        %p309 = pneg %p146
        %p310 = pneg %p143
        %p311 = pneg %p167
        %p312 = pneg %p164
        %p313 = pneg %p188
        %p314 = pneg %p185
        %p315 = pneg %p209
        %p316 = pneg %p206
        %p317 = pneg %p235
        %p318 = pneg %p232
        %s319 = sand.u32 %s222, 1
        %s320 = sand.u32 %s222, 1
        %s321 = smul.addr %s320, 12
        %s322 = scalar_lea.vmem [#allocation2], %s321
        %s323 = smul.u32 16, %s20
        %p324 = scmp.lt.s32.totalorder %s323, 31
        %s325 = scalar_select %p324, %s323, 31
        %s326 = smul.addr %s325, 4
        %s327 = scalar_lea.vmem %s0, %s326
        %s328 = smul.u32 16, %s20
        %v330 = vld [vmem:[%s327] sm:$0xf]
        %v331 = vld [vmem:[%s327 + $0x4] sm:$0xf]
        %v332 = vld [vmem:[%s327 + $0x8] sm:$0xf]
        %v333 = vld [vmem:[%s327 + $0xc] sm:$0xf]
        %v334 = vld [vmem:[%s327 + $0x10] sm:$0xf]
        %v335 = vld [vmem:[%s327 + $0x14] sm:$0xf]
        %v336 = vld [vmem:[%s327 + $0x18] sm:$0xf]
        %v337 = vld [vmem:[%s327 + $0x1c] sm:$0xf]
        %v338 = vld [vmem:[%s327 + $0x20] sm:$0xf]
        %v339 = vld [vmem:[%s327 + $0x24] sm:$0xf]
        %v340 = vld [vmem:[%s327 + $0x28] sm:$0xf]
        %v341 = vld [vmem:[%s327 + $0x2c] sm:$0xf]
        %v342 = vld [vmem:[%s327 + $0x30] sm:$0xf]
        %v343 = vld [vmem:[%s327 + $0x34] sm:$0xf]
        %v344 = vld [vmem:[%s327 + $0x38] sm:$0xf]
        %v345 = vld [vmem:[%s327 + $0x3c] sm:$0xf]
        %v346 = vld [vmem:[%s1] sm:$0xf]
        %v347 = vld [vmem:[%s1 + $0x4] sm:$0xf]
        %v348 = vld [vmem:[%s1 + $0x8] sm:$0xf]
        %v349 = vld [vmem:[%s1 + $0xc] sm:$0xf]
        %v350 = vld [vmem:[%s1 + $0x10] sm:$0xf]
        %v351 = vld [vmem:[%s1 + $0x14] sm:$0xf]
        %v352 = vld [vmem:[%s2] sm:$0xff]
        %v353 = vld [vmem:[%s2 + $0x8] sm:$0xff]
        %v354 = vld [vmem:[%s2 + $0x10] sm:$0xff]
        %v355 = vld [vmem:[%s2 + $0x18] sm:$0xff]
        %v356 = vld [vmem:[%s2 + $0x20] sm:$0xff]
        %v357 = vld [vmem:[%s2 + $0x28] sm:$0xff]
        %359 = vset.pattern.permute.xlu0 0
        %360 = vperm.xlu0 %359, %v352
        %v361 = vpop.permute.xlu0 %360
        %364 = vset.pattern.permute.xlu0 0
        %365 = vperm.xlu0 %364, %v353
        %v366 = vpop.permute.xlu0 %365
        %369 = vset.pattern.permute.xlu0 0
        %370 = vperm.xlu0 %369, %v354
        %v371 = vpop.permute.xlu0 %370
        %374 = vset.pattern.permute.xlu0 0
        %375 = vperm.xlu0 %374, %v355
        %v376 = vpop.permute.xlu0 %375
        %379 = vset.pattern.permute.xlu0 0
        %380 = vperm.xlu0 %379, %v356
        %v381 = vpop.permute.xlu0 %380
        %384 = vset.pattern.permute.xlu0 0
        %385 = vperm.xlu0 %384, %v357
        %v386 = vpop.permute.xlu0 %385
        %v394 = vunpack.c.l.b16 %v346
        %v395 = vunpack.c.l.b16 %v347
        %v396 = vunpack.c.l.b16 %v348
        %v397 = vunpack.c.l.b16 %v349
        %v398 = vunpack.c.l.b16 %v350
        %v399 = vunpack.c.l.b16 %v351
        %v400 = vpack.c.b16 %v395, %v394
        %v401 = vpack.c.b16 %v397, %v396
        %v402 = vpack.c.b16 %v399, %v398
        %v419 = vunpack.c.l.b16 %v330
        %v420 = vunpack.c.l.b16 %v331
        %v421 = vunpack.c.l.b16 %v332
        %v422 = vunpack.c.l.b16 %v333
        %v423 = vunpack.c.l.b16 %v334
        %v424 = vunpack.c.l.b16 %v335
        %v425 = vunpack.c.l.b16 %v336
        %v426 = vunpack.c.l.b16 %v337
        %v427 = vunpack.c.l.b16 %v338
        %v428 = vunpack.c.l.b16 %v339
        %v429 = vunpack.c.l.b16 %v340
        %v430 = vunpack.c.l.b16 %v341
        %v431 = vunpack.c.l.b16 %v342
        %v432 = vunpack.c.l.b16 %v343
        %v433 = vunpack.c.l.b16 %v344
        %v434 = vunpack.c.l.b16 %v345
        %v435 = vpack.c.b16 %v420, %v419
        %v436 = vpack.c.b16 %v422, %v421
        %v437 = vpack.c.b16 %v424, %v423
        %v438 = vpack.c.b16 %v426, %v425
        %v439 = vpack.c.b16 %v428, %v427
        %v440 = vpack.c.b16 %v430, %v429
        %v441 = vpack.c.b16 %v432, %v431
        %v442 = vpack.c.b16 %v434, %v433
        %vm443 = vcmask 195584
        %v445 = vsel %vm443, %v400, 0
        %v448 = vsel %vm443, %v401, 0
        %v451 = vsel %vm443, %v402, 0
        %v454 = vsel %vm443, %v435, 0
        %v457 = vsel %vm443, %v436, 0
        %v460 = vsel %vm443, %v437, 0
        %v463 = vsel %vm443, %v438, 0
        %v466 = vsel %vm443, %v439, 0
        %v469 = vsel %vm443, %v440, 0
        %v472 = vsel %vm443, %v441, 0
        %v475 = vsel %vm443, %v442, 0
        %477 = vmatprep.subr.bf16.mxu0 0
        %478 = vmatpush1.bf16.xpose.msra.mxu0 %v454
        %479 = vmatprep.subr.bf16.mxu0 0
        %480 = vmatpush1.bf16.xpose.msra.mxu0 %v457
        %481 = vmatprep.subr.bf16.mxu0 0
        %482 = vmatpush1.bf16.xpose.msra.mxu0 %v460
        %483 = vmatprep.subr.bf16.mxu0 0
        %484 = vmatpush1.bf16.xpose.msra.mxu0 %v463
        %485 = vmatprep.subr.bf16.mxu0 0
        %486 = vmatpush1.bf16.xpose.msra.mxu0 %v466
        %487 = vmatprep.subr.bf16.mxu0 0
        %488 = vmatpush1.bf16.xpose.msra.mxu0 %v469
        %489 = vmatprep.subr.bf16.mxu0 0
        %490 = vmatpush1.bf16.xpose.msra.mxu0 %v472
        %491 = vmatprep.subr.bf16.mxu0 0
        %492 = vmatpush1.bf16.xpose.msra.mxu0 %v475
        %493 = vmatprep.subr.bf16.mxu0 0
        %494 = vmatpush1.bf16.xpose.msra.mxu0 0
        %495 = vmatprep.subr.bf16.mxu0 0
        %496 = vmatpush1.bf16.xpose.msra.mxu0 0
        %497 = vmatprep.subr.bf16.mxu0 0
        %498 = vmatpush1.bf16.xpose.msra.mxu0 0
        %499 = vmatprep.subr.bf16.mxu0 0
        %500 = vmatpush1.bf16.xpose.msra.mxu0 0
        %501 = vmatprep.subr.bf16.mxu0 0
        %502 = vmatpush1.bf16.xpose.msra.mxu0 0
        %503 = vmatprep.subr.bf16.mxu0 0
        %504 = vmatpush1.bf16.xpose.msra.mxu0 0
        %505 = vmatprep.subr.bf16.mxu0 0
        %506 = vmatpush1.bf16.xpose.msra.mxu0 0
        %507 = vmatprep.subr.bf16.mxu0 0
        %508 = vmatpush1.bf16.xpose.msra.mxu0 0
        %509 = vmatprep.mubr.bf16.mxu0 0
        %510 = vmatmul.mubr.bf16.gmra.mrb[0].mxu0 %v445
        %v511 = vpop.f32.mrb[0].mxu0
        %v512 = vadd.f32 %v361, %v511
        %v513 = vpop.f32.mrb[0].mxu0
        %v514 = vpop.f32.mrb[0].mxu0
        %v515 = vadd.f32 %v366, %v514
        %v516 = vpop.f32.mrb[0].mxu0
        %517 = vmatprep.mubr.bf16.mxu0 0
        %518 = vmatmul.mubr.bf16.gmra.mrb[0].mxu0 %v448
        %v519 = vpop.f32.mrb[0].mxu0
        %v520 = vadd.f32 %v371, %v519
        %v521 = vpop.f32.mrb[0].mxu0
        %v522 = vpop.f32.mrb[0].mxu0
        %v523 = vadd.f32 %v376, %v522
        %v524 = vpop.f32.mrb[0].mxu0
        %525 = vmatprep.mubr.bf16.mxu0 0
        %526 = vmatmul.mubr.bf16.gmra.mrb[0].mxu0 %v451
        %v527 = vpop.f32.mrb[0].mxu0
        %v528 = vadd.f32 %v381, %v527
        %v529 = vpop.f32.mrb[0].mxu0
        %v530 = vpop.f32.mrb[0].mxu0
        %v531 = vadd.f32 %v386, %v530
        %v532 = vpop.f32.mrb[0].mxu0
        %533 = vdwg.mxu0
        %v534 = vmax.f32 %v512, 0.0
        %v535 = vmax.f32 %v515, 0.0
        %v536 = vmax.f32 %v520, 0.0
        %v537 = vmax.f32 %v523, 0.0
        %v538 = vmax.f32 %v528, 0.0
        %v539 = vmax.f32 %v531, 0.0
        %v540 = vld [vmem:[%s3] sm:$0xf]
        %v541 = vld [vmem:[%s3 + $0x4] sm:$0x3]
        %v542 = vpack.c.bf16 %v535, %v534
        %v543 = vpack.c.bf16 %v537, %v536
        %v544 = vpack.c.bf16 %v539, %v538
        %v545 = vld [vmem:[%s4] sm:$0xff]
        %v546 = vld [vmem:[%s4 + $0x8] sm:$0xf]
        %548 = vset.pattern.permute.xlu0 0
        %549 = vperm.xlu0 %548, %v545
        %v550 = vpop.permute.xlu0 %549
        %553 = vset.pattern.permute.xlu0 0
        %554 = vperm.xlu0 %553, %v546
        %v555 = vpop.permute.xlu0 %554
        %v559 = vunpack.c.l.b16 %v540
        %v560 = vunpack.c.l.b16 %v541
        %v561 = vpack.c.b16 %v560, %v559
        %vm562 = vcmask 392192
        %v564 = vsel %vm562, %v561, 0
        %566 = vmatprep.subr.bf16.mxu0 0
        %567 = vmatpush1.bf16.msra.mxu0 %v542
        %568 = vmatprep.subr.bf16.mxu0 0
        %569 = vmatpush1.bf16.msra.mxu0 %v543
        %570 = vmatprep.subr.bf16.mxu0 0
        %571 = vmatpush1.bf16.msra.mxu0 %v544
        %572 = vmatprep.subr.bf16.mxu0 0
        %573 = vmatpush1.bf16.msra.mxu0 0
        %574 = vmatprep.subr.bf16.mxu0 0
        %575 = vmatpush1.bf16.msra.mxu0 0
        %576 = vmatprep.subr.bf16.mxu0 0
        %577 = vmatpush1.bf16.msra.mxu0 0
        %578 = vmatprep.subr.bf16.mxu0 0
        %579 = vmatpush1.bf16.msra.mxu0 0
        %580 = vmatprep.subr.bf16.mxu0 0
        %581 = vmatpush1.bf16.msra.mxu0 0
        %582 = vmatprep.subr.bf16.mxu0 0
        %583 = vmatpush1.bf16.msra.mxu0 0
        %584 = vmatprep.subr.bf16.mxu0 0
        %585 = vmatpush1.bf16.msra.mxu0 0
        %586 = vmatprep.subr.bf16.mxu0 0
        %587 = vmatpush1.bf16.msra.mxu0 0
        %588 = vmatprep.subr.bf16.mxu0 0
        %589 = vmatpush1.bf16.msra.mxu0 0
        %590 = vmatprep.subr.bf16.mxu0 0
        %591 = vmatpush1.bf16.msra.mxu0 0
        %592 = vmatprep.subr.bf16.mxu0 0
        %593 = vmatpush1.bf16.msra.mxu0 0
        %594 = vmatprep.subr.bf16.mxu0 0
        %595 = vmatpush1.bf16.msra.mxu0 0
        %596 = vmatprep.subr.bf16.mxu0 0
        %597 = vmatpush1.bf16.msra.mxu0 0
        %598 = vmatprep.mubr.bf16.mxu0 0
        %599 = vmatmul.mubr.bf16.gmra.mrb[0].mxu0 %v564
        %v600 = vpop.f32.mrb[0].mxu0
        %v601 = vadd.f32 %v550, %v600
        %v602 = vpop.f32.mrb[0].mxu0
        %v603 = vpop.f32.mrb[0].mxu0
        %v604 = vadd.f32 %v555, %v603
        %v605 = vpop.f32.mrb[0].mxu0
        %606 = vdwg.mxu0
        %v607 = vld [vmem:[%s5] sm:$0xf]
        %v608 = vld [vmem:[%s5 + $0x4] sm:$0xf]
        %v609 = vld [vmem:[%s5 + $0x8] sm:$0xf]
        %v610 = vld [vmem:[%s5 + $0xc] sm:$0xf]
        %v611 = vld [vmem:[%s5 + $0x10] sm:$0xf]
        %v612 = vld [vmem:[%s5 + $0x14] sm:$0xf]
        %v613 = vpack.c.bf16 %v604, %v601
        %v614 = vld [vmem:[%s6] sm:$0xff]
        %v615 = vld [vmem:[%s6 + $0x8] sm:$0xff]
        %v616 = vld [vmem:[%s6 + $0x10] sm:$0xff]
        %v617 = vld [vmem:[%s6 + $0x18] sm:$0xff]
        %v618 = vld [vmem:[%s6 + $0x20] sm:$0xff]
        %v619 = vld [vmem:[%s6 + $0x28] sm:$0xff]
        %621 = vset.pattern.permute.xlu0 0
        %622 = vperm.xlu0 %621, %v614
        %v623 = vpop.permute.xlu0 %622
        %626 = vset.pattern.permute.xlu0 0
        %627 = vperm.xlu0 %626, %v615
        %v628 = vpop.permute.xlu0 %627
        %631 = vset.pattern.permute.xlu0 0
        %632 = vperm.xlu0 %631, %v616
        %v633 = vpop.permute.xlu0 %632
        %636 = vset.pattern.permute.xlu0 0
        %637 = vperm.xlu0 %636, %v617
        %v638 = vpop.permute.xlu0 %637
        %641 = vset.pattern.permute.xlu0 0
        %642 = vperm.xlu0 %641, %v618
        %v643 = vpop.permute.xlu0 %642
        %646 = vset.pattern.permute.xlu0 0
        %647 = vperm.xlu0 %646, %v619
        %v648 = vpop.permute.xlu0 %647
        %v656 = vunpack.c.l.b16 %v607
        %v657 = vunpack.c.l.b16 %v608
        %v658 = vunpack.c.l.b16 %v609
        %v659 = vunpack.c.l.b16 %v610
        %v660 = vunpack.c.l.b16 %v611
        %v661 = vunpack.c.l.b16 %v612
        %v662 = vpack.c.b16 %v657, %v656
        %v663 = vpack.c.b16 %v659, %v658
        %v664 = vpack.c.b16 %v661, %v660
        %vm665 = vcmask 97280
        %v667 = vsel %vm665, %v662, 0
        %v670 = vsel %vm665, %v663, 0
        %v673 = vsel %vm665, %v664, 0
        %vm675 = vcmask 1045504
        %v677 = vsel %vm675, %v613, 0
        %679 = vmatprep.subr.bf16.mxu0 0
        %680 = vmatpush1.bf16.msra.mxu0 %v677
        %681 = vmatprep.subr.bf16.mxu0 0
        %682 = vmatpush1.bf16.msra.mxu0 0
        %683 = vmatprep.subr.bf16.mxu0 0
        %684 = vmatpush1.bf16.msra.mxu0 0
        %685 = vmatprep.subr.bf16.mxu0 0
        %686 = vmatpush1.bf16.msra.mxu0 0
        %687 = vmatprep.subr.bf16.mxu0 0
        %688 = vmatpush1.bf16.msra.mxu0 0
        %689 = vmatprep.subr.bf16.mxu0 0
        %690 = vmatpush1.bf16.msra.mxu0 0
        %691 = vmatprep.subr.bf16.mxu0 0
        %692 = vmatpush1.bf16.msra.mxu0 0
        %693 = vmatprep.subr.bf16.mxu0 0
        %694 = vmatpush1.bf16.msra.mxu0 0
        %695 = vmatprep.subr.bf16.mxu0 0
        %696 = vmatpush1.bf16.msra.mxu0 0
        %697 = vmatprep.subr.bf16.mxu0 0
        %698 = vmatpush1.bf16.msra.mxu0 0
        %699 = vmatprep.subr.bf16.mxu0 0
        %700 = vmatpush1.bf16.msra.mxu0 0
        %701 = vmatprep.subr.bf16.mxu0 0
        %702 = vmatpush1.bf16.msra.mxu0 0
        %703 = vmatprep.subr.bf16.mxu0 0
        %704 = vmatpush1.bf16.msra.mxu0 0
        %705 = vmatprep.subr.bf16.mxu0 0
        %706 = vmatpush1.bf16.msra.mxu0 0
        %707 = vmatprep.subr.bf16.mxu0 0
        %708 = vmatpush1.bf16.msra.mxu0 0
        %709 = vmatprep.subr.bf16.mxu0 0
        %710 = vmatpush1.bf16.msra.mxu0 0
        %711 = vmatprep.mubr.bf16.mxu0 0
        %712 = vmatmul.mubr.bf16.gmra.mrb[0].mxu0 %v667
        %v713 = vpop.f32.mrb[0].mxu0
        %v714 = vadd.f32 %v623, %v713
        %v715 = vpop.f32.mrb[0].mxu0
        %v716 = vpop.f32.mrb[0].mxu0
        %v717 = vadd.f32 %v628, %v716
        %v718 = vpop.f32.mrb[0].mxu0
        %719 = vmatprep.mubr.bf16.mxu0 0
        %720 = vmatmul.mubr.bf16.gmra.mrb[0].mxu0 %v670
        %v721 = vpop.f32.mrb[0].mxu0
        %v722 = vadd.f32 %v633, %v721
        %v723 = vpop.f32.mrb[0].mxu0
        %v724 = vpop.f32.mrb[0].mxu0
        %v725 = vadd.f32 %v638, %v724
        %v726 = vpop.f32.mrb[0].mxu0
        %727 = vmatprep.mubr.bf16.mxu0 0
        %728 = vmatmul.mubr.bf16.gmra.mrb[0].mxu0 %v673
        %v729 = vpop.f32.mrb[0].mxu0
        %v730 = vadd.f32 %v643, %v729
        %v731 = vpop.f32.mrb[0].mxu0
        %v732 = vpop.f32.mrb[0].mxu0
        %v733 = vadd.f32 %v648, %v732
        %v734 = vpop.f32.mrb[0].mxu0
        %735 = vdwg.mxu0
        %v736 = vmax.f32 %v714, 0.0
        %v737 = vmax.f32 %v717, 0.0
        %v738 = vmax.f32 %v722, 0.0
        %v739 = vmax.f32 %v725, 0.0
        %v740 = vmax.f32 %v730, 0.0
        %v741 = vmax.f32 %v733, 0.0
        %v742 = vld [vmem:[%s7] sm:$0xf]
        %v743 = vld [vmem:[%s7 + $0x4] sm:$0xf]
        %v744 = vld [vmem:[%s7 + $0x8] sm:$0xf]
        %v745 = vpack.c.bf16 %v737, %v736
        %v746 = vpack.c.bf16 %v739, %v738
        %v747 = vpack.c.bf16 %v741, %v740
        %v748 = vld [vmem:[%s8] sm:$0xff]
        %v749 = vld [vmem:[%s8 + $0x8] sm:$0xff]
        %v750 = vld [vmem:[%s8 + $0x10] sm:$0xff]
        %752 = vset.pattern.permute.xlu0 0
        %753 = vperm.xlu0 %752, %v748
        %v754 = vpop.permute.xlu0 %753
        %757 = vset.pattern.permute.xlu0 0
        %758 = vperm.xlu0 %757, %v749
        %v759 = vpop.permute.xlu0 %758
        %762 = vset.pattern.permute.xlu0 0
        %763 = vperm.xlu0 %762, %v750
        %v764 = vpop.permute.xlu0 %763
        %v769 = vunpack.c.l.b16 %v742
        %v770 = vunpack.c.l.b16 %v743
        %v771 = vunpack.c.l.b16 %v744
        %v772 = vpack.c.b16 %v770, %v769
        %v773 = vpack.c.b16 %v771, %v771
        %v775 = vsel %vm562, %v772, 0
        %v778 = vsel %vm562, %v773, 0
        %780 = vmatprep.subr.bf16.mxu0 0
        %781 = vmatpush1.bf16.msra.mxu0 %v745
        %782 = vmatprep.subr.bf16.mxu0 0
        %783 = vmatpush1.bf16.msra.mxu0 %v746
        %784 = vmatprep.subr.bf16.mxu0 0
        %785 = vmatpush1.bf16.msra.mxu0 %v747
        %786 = vmatprep.subr.bf16.mxu0 0
        %787 = vmatpush1.bf16.msra.mxu0 0
        %788 = vmatprep.subr.bf16.mxu0 0
        %789 = vmatpush1.bf16.msra.mxu0 0
        %790 = vmatprep.subr.bf16.mxu0 0
        %791 = vmatpush1.bf16.msra.mxu0 0
        %792 = vmatprep.subr.bf16.mxu0 0
        %793 = vmatpush1.bf16.msra.mxu0 0
        %794 = vmatprep.subr.bf16.mxu0 0
        %795 = vmatpush1.bf16.msra.mxu0 0
        %796 = vmatprep.subr.bf16.mxu0 0
        %797 = vmatpush1.bf16.msra.mxu0 0
        %798 = vmatprep.subr.bf16.mxu0 0
        %799 = vmatpush1.bf16.msra.mxu0 0
        %800 = vmatprep.subr.bf16.mxu0 0
        %801 = vmatpush1.bf16.msra.mxu0 0
        %802 = vmatprep.subr.bf16.mxu0 0
        %803 = vmatpush1.bf16.msra.mxu0 0
        %804 = vmatprep.subr.bf16.mxu0 0
        %805 = vmatpush1.bf16.msra.mxu0 0
        %806 = vmatprep.subr.bf16.mxu0 0
        %807 = vmatpush1.bf16.msra.mxu0 0
        %808 = vmatprep.subr.bf16.mxu0 0
        %809 = vmatpush1.bf16.msra.mxu0 0
        %810 = vmatprep.subr.bf16.mxu0 0
        %811 = vmatpush1.bf16.msra.mxu0 0
        %812 = vmatprep.mubr.bf16.mxu0 0
        %813 = vmatmul.mubr.bf16.gmra.mrb[0].mxu0 %v775
        %v814 = vpop.f32.mrb[0].mxu0
        %v815 = vadd.f32 %v754, %v814
        %v816 = vpop.f32.mrb[0].mxu0
        %v817 = vpop.f32.mrb[0].mxu0
        %v818 = vadd.f32 %v759, %v817
        %v819 = vpop.f32.mrb[0].mxu0
        %820 = vmatprep.mubr.bf16.mxu0 0
        %821 = vmatmul.mubr.bf16.gmra.mrb[0].mxu0 %v778
        %v822 = vpop.f32.mrb[0].mxu0
        %v823 = vadd.f32 %v764, %v822
        %v824 = vpop.f32.mrb[0].mxu0
        %v825 = vpop.f32.mrb[0].mxu0
        %v826 = vpop.f32.mrb[0].mxu0
        %827 = vdwg.mxu0
        %v828 = vpack.c.bf16 %v818, %v815
        %v829 = vpack.c.bf16 %v823, %v823
        %v832 = vunpack.c.l.b16 %v828
        %v833 = vunpack.c.h.b16 %v828
        %v834 = vunpack.c.l.b16 %v829
        %v835 = vpack.c.b16 %v832, %v832
        %v836 = vpack.c.b16 %v833, %v833
        %v837 = vpack.c.b16 %v834, %v834
        %841 = vst [vmem:[%s322] sm:$0xf] %v835
        %842 = vst [vmem:[%s322 + $0x4] sm:$0xf] %v836
        %843 = vst [vmem:[%s322 + $0x8] sm:$0xf] %v837
        %s844 = sand.u32 %s222, 1
        %s845 = sand.u32 %s222, 1
        %s846 = smul.addr %s845, 12
        %s847 = scalar_lea.vmem [#allocation2], %s846
        // Predicated region
        $region57: #{_sae_forward_2d.1} parent=55 // pred_check
          %p848 = pneg %p232
        $region58: #{_sae_forward_2d.1} parent=55 // pred_check_branch
          %850 = sbr.rel (%p848) target = $region60
        $region59: #{_sae_forward_2d.1} parent=55 // pred_region
          %s851 = smul.addr %s20, 4
          %s852 = scalar_lea.vmem %s9, %s851
          // Predicated region
          $region61: #{_sae_forward_2d.1} parent=59 // pred_check
            _
          $region62: #{_sae_forward_2d.1} parent=59 // pred_check_branch
            %854 = sbr.rel (0) target = $region64
          $region63: #{_sae_forward_2d.1} parent=59 // pred_region
            // Predicated region
            $region65: #{_sae_forward_2d.1} parent=63 // pred_check
              _
            $region66: #{_sae_forward_2d.1} parent=63 // pred_check_branch
              %856 = sbr.rel target = $region68
            $region67: #{_sae_forward_2d.1} parent=63 // pred_region
              // Predicated region
              $region80: #{_sae_forward_2d.1} parent=67 // pred_check
                _
              $region81: #{_sae_forward_2d.1} parent=67 // pred_check_branch
                %875 = sbr.rel (0) target = $region83
              $region82: #{_sae_forward_2d.1} parent=67 // pred_region
                loop: start=0, step=1, limit=1
                $region84: #{_sae_forward_2d.1} parent=82 // loop_pre_header
                  _
                $region85: #{_sae_forward_2d.1} parent=82 // loop_header
                  %s877 = sphi 0, %s881
                  %p878 = scmp.ge.s32.totalorder %s877, 1
                  %s882 = sphi %s847, %s847
                  %s883 = sphi %s852, %s852
                $region86: #{_sae_forward_2d.1} parent=82 // loop_header_branch
                  %880 = sbr.rel (%p878) target = $region90
                $region87: #{_sae_forward_2d.1} parent=82 // loop_body
                  _
                $region88: #{_sae_forward_2d.1} parent=82 // loop_footer
                  %s881 = sadd.s32 1, %s877
                $region89: #{_sae_forward_2d.1} parent=82 // loop_footer_branch
                  %876 = sbr.rel target = $region85
                $region90: #{_sae_forward_2d.1} parent=82 // loop_exit
                  _
                loop: start=0, step=1, limit=1
                $region91: #{_sae_forward_2d.1} parent=82 // loop_pre_header
                  _
                $region92: #{_sae_forward_2d.1} parent=82 // loop_header
                  %s886 = sphi 0, %s890
                  %p887 = scmp.ge.s32.totalorder %s886, 1
                  %s891 = sphi %s847, %s847
                  %s892 = sphi %s852, %s852
                $region93: #{_sae_forward_2d.1} parent=82 // loop_header_branch
                  %889 = sbr.rel (%p887) target = $region97
                $region94: #{_sae_forward_2d.1} parent=82 // loop_body
                  %v893 = vld [vmem:[%s891] sm:$0xf]
                  %894 = vst [vmem:[%s892] sm:$0xf] %v893
                  %v895 = vld [vmem:[%s891 + $0x4] sm:$0xf]
                  %896 = vst [vmem:[%s892 + $0x8] sm:$0xf] %v895
                  %v897 = vld [vmem:[%s891 + $0x8] sm:$0xf]
                  %898 = vst [vmem:[%s892 + $0x10] sm:$0xf] %v897
                $region95: #{_sae_forward_2d.1} parent=82 // loop_footer
                  %s890 = sadd.s32 1, %s886
                $region96: #{_sae_forward_2d.1} parent=82 // loop_footer_branch
                  %885 = sbr.rel target = $region92
                $region97: #{_sae_forward_2d.1} parent=82 // loop_exit
                  _
              $region83: #{_sae_forward_2d.1} parent=67 // pred_fallthru
                _
            $region68: #{_sae_forward_2d.1} parent=63 // pred_fallthru
              _
            // Predicated region
            $region69: #{_sae_forward_2d.1} parent=63 // pred_check
              _
            $region70: #{_sae_forward_2d.1} parent=63 // pred_check_branch
              %858 = sbr.rel (0) target = $region72
            $region71: #{_sae_forward_2d.1} parent=63 // pred_region
              loop: start=0, step=1, limit=1
              $region73: #{_sae_forward_2d.1} parent=71 // loop_pre_header
                _
              $region74: #{_sae_forward_2d.1} parent=71 // loop_header
                %s861 = sphi 0, %s865
                %p862 = scmp.ge.s32.totalorder %s861, 1
                %s866 = sphi %s847, %s847
                %s867 = sphi %s852, %s852
              $region75: #{_sae_forward_2d.1} parent=71 // loop_header_branch
                %864 = sbr.rel (%p862) target = $region79
              $region76: #{_sae_forward_2d.1} parent=71 // loop_body
                %v868 = vld [vmem:[%s866] sm:$0xf]
                %869 = vst [vmem:[%s867] sm:$0xf] %v868
                %v870 = vld [vmem:[%s866 + $0x4] sm:$0xf]
                %871 = vst [vmem:[%s867 + $0x8] sm:$0xf] %v870
                %v872 = vld [vmem:[%s866 + $0x8] sm:$0xf]
                %873 = vst [vmem:[%s867 + $0x10] sm:$0xf] %v872
              $region77: #{_sae_forward_2d.1} parent=71 // loop_footer
                %s865 = sadd.s32 1, %s861
              $region78: #{_sae_forward_2d.1} parent=71 // loop_footer_branch
                %860 = sbr.rel target = $region74
              $region79: #{_sae_forward_2d.1} parent=71 // loop_exit
                _
            $region72: #{_sae_forward_2d.1} parent=63 // pred_fallthru
              _
          $region64: #{_sae_forward_2d.1} parent=59 // pred_fallthru
            _
          %899 = vnop
        $region60: #{_sae_forward_2d.1} parent=55 // pred_fallthru
          _
      $region56: #{_sae_forward_2d.1} parent=5 // pred_fallthru
        _
      %p900 = scmp.le.s32.totalorder 2, %s15
      // Predicated region
      $region98: #{_sae_forward_2d.1} parent=5 // pred_check
        %p901 = pneg %p900
      $region99: #{_sae_forward_2d.1} parent=5 // pred_check_branch
        %903 = sbr.rel (%p901) target = $region101
      $region100: #{_sae_forward_2d.1} parent=5 // pred_region
        %s904 = ssub.s32 %s15, 2
        // Predicated region
        $region102: #{_sae_forward_2d.1} parent=100 // pred_check
          %p905 = pneg %p238
        $region103: #{_sae_forward_2d.1} parent=100 // pred_check_branch
          %907 = sbr.rel (%p905) target = $region105
        $region104: #{_sae_forward_2d.1} parent=100 // pred_region
          %s908 = sand.u32 %s223, 1
          %s909 = sand.u32 %s223, 1
          %s910 = smul.addr %s909, 12
          %s911 = scalar_lea.vmem [#allocation2], %s910
        $region105: #{_sae_forward_2d.1} parent=100 // pred_fallthru
          _
      $region101: #{_sae_forward_2d.1} parent=5 // pred_fallthru
        _
    $region6: #{_sae_forward_2d.1} parent=1 // loop_footer
      %s19 = sadd.s32 1, %s15
    $region7: #{_sae_forward_2d.1} parent=1 // loop_footer_branch
      %14 = sbr.rel target = $region3
    $region8: #{_sae_forward_2d.1} parent=1 // loop_exit
      _

</llo_original>
